<compile_context>
chip_gen: v6e
topology: v6e:2x2x1
jax: 0.10.0
libtpu: 0.0.40
codegen_flags: <defaults>
</compile_context>

<pallas_src>
import functools

import numpy as np
import jax
import jax.numpy as jnp
from jax.experimental import pallas as pl
from jax.experimental.pallas import tpu as pltpu


# ---------------- configuration (mirrors BsplineLoss.__init__) ----------------
class Config:
    scale_bspline_loss = 0.1
    bspline_control_points = 4   # self.n
    bspline_order = 3            # self.k


NUM_T = 16  # len(self.t_values)


def cox_de_boor_basis(n, k, t_values, knots):
    """Deterministic replacement for bspline_cache.get_bspline_coefficient.

    Returns the (len(t_values), n) B-spline basis matrix via Cox-de Boor.
    """
    t = np.asarray(t_values, dtype=np.float64)
    knots = np.asarray(knots, dtype=np.float64)
    m = len(knots) - 1
    basis = np.zeros((len(t), m), dtype=np.float64)
    for i in range(m):
        basis[:, i] = np.where((t >= knots[i]) & (t < knots[i + 1]), 1.0, 0.0)
    for p in range(1, k + 1):
        new = np.zeros((len(t), m - p), dtype=np.float64)
        for i in range(m - p):
            d1 = knots[i + p] - knots[i]
            d2 = knots[i + p + 1] - knots[i + 1]
            t1 = ((t - knots[i]) / d1) * basis[:, i] if d1 > 0 else 0.0
            t2 = ((knots[i + p + 1] - t) / d2) * basis[:, i + 1] if d2 > 0 else 0.0
            new[:, i] = t1 + t2
        basis = new
    assert basis.shape[1] == n
    return basis.astype(np.float32)


# --------------------------------- kernel -------------------------------------
def _bspline_chamfer_kernel(basis_ref, spm_ref, cpm_ref, out_ref, *,
                            scale, num_prims, batch, num_skel):
    """Chamfer(BsplineCurves(control_points), skeletal_points) for all batches.

    basis_ref : (T, n)        bspline basis, shared across batches           (VMEM)
    spm_ref   : (3, B*Na)     skeletal points, coord-major, lane col b*Na+a  (VMEM)
    cpm_ref   : (n, B*3N)     control points, lane col b*3N + d*N + j        (VMEM)
    out_ref   : (B,)          per-batch scalar loss                          (SMEM)
    """
    N = num_prims
    Na = num_skel
    basis = basis_ref[...]                                       # (T, n)
    T = basis.shape[0]

    # Single MXU matmul evaluates every curve coordinate of every batch:
    #   C_all[t, b*3N + d*N + j] = coord d of primitive j at parameter t (batch b).
    C_all = jnp.dot(basis, cpm_ref[...],
                    preferred_element_type=jnp.float32)          # (T, B*3N)
    spm = spm_ref[...]                                           # (3, B*Na)

    for b in range(batch):                                       # B small: unrolled
        sx = spm[0:1, b * Na:(b + 1) * Na]                       # (1, Na) static slices
        sy = spm[1:2, b * Na:(b + 1) * Na]
        sz = spm[2:3, b * Na:(b + 1) * Na]
        base = b * 3 * N

        skel_min = jnp.full((1, Na), jnp.inf, dtype=jnp.float32)
        curve_sqrt_acc = jnp.zeros((T, 1), dtype=jnp.float32)

        for j in range(N):                                       # N small: unrolled
            cx = C_all[:, base + 0 * N + j: base + 0 * N + j + 1]   # (T, 1)
            cy = C_all[:, base + 1 * N + j: base + 1 * N + j + 1]
            cz = C_all[:, base + 2 * N + j: base + 2 * N + j + 1]
            dx = cx - sx                                         # (T, Na)
            dy = cy - sy
            dz = cz - sz
            d2 = dx * dx + dy * dy + dz * dz                     # squared distances

            # sqrt deferred past the min reductions (monotonic => same loss).
            curve_sqrt_acc = curve_sqrt_acc + jnp.sqrt(
                jnp.min(d2, axis=1, keepdims=True))              # (T, 1)
            skel_min = jnp.minimum(skel_min,
                                   jnp.min(d2, axis=0, keepdims=True))

        chamfer_curve = jnp.sum(curve_sqrt_acc) / (N * T)        # mean over curve pts
        chamfer_skel = jnp.mean(jnp.sqrt(skel_min))              # mean over skel pts
        out_ref[b] = (chamfer_skel + chamfer_curve) * scale


# -------------------------------- wrapper --------------------------------------
def bspline_loss_pallas(skeletal_points, primitive_parameters, basis, n, scale):
    B, N, _ = primitive_parameters.shape
    Na = skeletal_points.shape[1]

    # Glue (outside the kernel): parameter slicing / layout rearrangement.
    # cp[b, j, i, d] = primitive_parameters[b, j, i*3 + d]
    cp = primitive_parameters[:, :, : n * 3].reshape(B, N, n, 3)
    # cpm[i, b*3N + d*N + j] = coord d of control point i of primitive j (batch b).
    cpm = jnp.transpose(cp, (2, 0, 3, 1)).reshape(n, B * 3 * N).astype(jnp.float32)
    # spm[d, b*Na + a] = coord d of skeletal point a (batch b).
    spm = jnp.transpose(skeletal_points, (2, 0, 1)).reshape(3, B * Na)
    spm = spm.astype(jnp.float32)
    basis = basis.astype(jnp.float32)                                    # (T, n)

    out = pl.pallas_call(
        functools.partial(_bspline_chamfer_kernel, scale=scale,
                          num_prims=N, batch=B, num_skel=Na),
        out_shape=jax.ShapeDtypeStruct((B,), jnp.float32),
        in_specs=[
            pl.BlockSpec(memory_space=pltpu.MemorySpace.VMEM),   # basis (T, n)
            pl.BlockSpec(memory_space=pltpu.MemorySpace.VMEM),   # spm   (3, B*Na)
            pl.BlockSpec(memory_space=pltpu.MemorySpace.VMEM),   # cpm   (n, B*3N)
        ],
        out_specs=pl.BlockSpec(memory_space=pltpu.MemorySpace.SMEM),
    )(basis, spm, cpm)
    return out   # (B,)


# ------------------------- pure-JAX reference (torch semantics) ----------------
def bspline_loss_reference(skeletal_points, primitive_parameters, basis, n, scale):
    B, N, _ = primitive_parameters.shape
    control_points = primitive_parameters[:, :, : n * 3].reshape(-1, n, 3)
    curves = jnp.matmul(basis, control_points).reshape(B, -1, 3)
    a = skeletal_points
    diff = a[:, :, None, :] - curves[:, None, :, :]
    dist = jnp.sqrt(jnp.sum(diff * diff, axis=-1))
    chamfer_a = jnp.mean(jnp.min(dist, axis=2), axis=1)
    chamfer_b = jnp.mean(jnp.min(dist, axis=1), axis=1)
    return (chamfer_a + chamfer_b) * scale


# ---------------------------------- main ---------------------------------------
if __name__ == "__main__":
    cfg = Config()
    n, k, scale = cfg.bspline_control_points, cfg.bspline_order, cfg.scale_bspline_loss

    t_values = np.linspace(0.0, 0.9999, NUM_T)
    knots = np.concatenate(
        [np.zeros(k), np.linspace(0.0, 1.0, n - k + 1), np.ones(k)]
    )
    basis = jnp.asarray(cox_de_boor_basis(n, k, t_values, knots))  # (16, n)

    # Small deterministic inputs.
    B, N_prims, P_dim, Na = 2, 4, 14, 32
    key = jax.random.PRNGKey(0)
    k1, k2 = jax.random.split(key)
    skeletal_points = jax.random.normal(k1, (B, Na, 3), dtype=jnp.float32)
    primitive_parameters = jax.random.normal(k2, (B, N_prims, P_dim), dtype=jnp.float32)

    loss = bspline_loss_pallas(skeletal_points, primitive_parameters, basis, n, scale)
    loss = jax.block_until_ready(loss)

    ref = bspline_loss_reference(skeletal_points, primitive_parameters, basis, n, scale)
    np.testing.assert_allclose(np.asarray(loss), np.asarray(ref), rtol=1e-4, atol=1e-5)

    print("KERNEL_OK")
</pallas_src>

<mosaic_0001>
module attributes {stable_mosaic.version = 11 : i64} {
  func.func @_bspline_chamfer_kernel(%arg0: memref<16x4xf32, #tpu.memory_space<vmem>>, %arg1: memref<3x64xf32, #tpu.memory_space<vmem>>, %arg2: memref<4x24xf32, #tpu.memory_space<vmem>>, %arg3: memref<2xf32, #tpu.memory_space<smem>>) attributes {dimension_semantics = [], scalar_prefetch = 0 : i64, scratch_operands = 0 : i64, tpu.core_type = #tpu.core_type<tc>} {
    %c0 = arith.constant 0 : index
    %c0_0 = arith.constant 0 : index
    %0 = vector.load %arg0[%c0, %c0_0] : memref<16x4xf32, #tpu.memory_space<vmem>>, vector<16x4xf32>
    %c0_1 = arith.constant 0 : index
    %c0_2 = arith.constant 0 : index
    %1 = vector.load %arg2[%c0_1, %c0_2] : memref<4x24xf32, #tpu.memory_space<vmem>>, vector<4x24xf32>
    %cst = arith.constant dense<0.000000e+00> : vector<16x24xf32>
    %2 = tpu.matmul %0, %1, %cst {dimension_numbers = #tpu.dot_dimension_numbers<[1], [0], [0], [1], [0, 0, 1, 1], [], []>} : vector<16x4xf32>, vector<4x24xf32>, vector<16x24xf32> -> vector<16x24xf32>
    %c0_3 = arith.constant 0 : index
    %c0_4 = arith.constant 0 : index
    %3 = vector.load %arg1[%c0_3, %c0_4] : memref<3x64xf32, #tpu.memory_space<vmem>>, vector<3x64xf32>
    %4 = vector.extract_strided_slice %3 {offsets = [0, 0], sizes = [1, 32], strides = [1, 1]} : vector<3x64xf32> to vector<1x32xf32>
    %5 = vector.extract_strided_slice %3 {offsets = [1, 0], sizes = [1, 32], strides = [1, 1]} : vector<3x64xf32> to vector<1x32xf32>
    %6 = vector.extract_strided_slice %3 {offsets = [2, 0], sizes = [1, 32], strides = [1, 1]} : vector<3x64xf32> to vector<1x32xf32>
    %cst_5 = arith.constant 0x7F800000 : f32
    %7 = vector.broadcast %cst_5 : f32 to vector<1x32xf32>
    %cst_6 = arith.constant 0.000000e+00 : f32
    %8 = vector.broadcast %cst_6 : f32 to vector<16x1xf32>
    %9 = vector.extract_strided_slice %2 {offsets = [0, 0], sizes = [16, 1], strides = [1, 1]} : vector<16x24xf32> to vector<16x1xf32>
    %10 = vector.extract_strided_slice %2 {offsets = [0, 4], sizes = [16, 1], strides = [1, 1]} : vector<16x24xf32> to vector<16x1xf32>
    %11 = vector.extract_strided_slice %2 {offsets = [0, 8], sizes = [16, 1], strides = [1, 1]} : vector<16x24xf32> to vector<16x1xf32>
    %12 = vector.broadcast %9 : vector<16x1xf32> to vector<16x32xf32>
    %13 = vector.broadcast %4 : vector<1x32xf32> to vector<16x32xf32>
    %14 = arith.subf %12, %13 : vector<16x32xf32>
    %15 = vector.broadcast %10 : vector<16x1xf32> to vector<16x32xf32>
    %16 = vector.broadcast %5 : vector<1x32xf32> to vector<16x32xf32>
    %17 = arith.subf %15, %16 : vector<16x32xf32>
    %18 = vector.broadcast %11 : vector<16x1xf32> to vector<16x32xf32>
    %19 = vector.broadcast %6 : vector<1x32xf32> to vector<16x32xf32>
    %20 = arith.subf %18, %19 : vector<16x32xf32>
    %21 = arith.mulf %14, %14 : vector<16x32xf32>
    %22 = arith.mulf %17, %17 : vector<16x32xf32>
    %23 = arith.addf %21, %22 : vector<16x32xf32>
    %24 = arith.mulf %20, %20 : vector<16x32xf32>
    %25 = arith.addf %23, %24 : vector<16x32xf32>
    %cst_7 = arith.constant dense<0x7F800000> : vector<16xf32>
    %26 = vector.multi_reduction <minimumf>, %25, %cst_7 [1] : vector<16x32xf32> to vector<16xf32>
    %27 = vector.shape_cast %26 : vector<16xf32> to vector<16x1xf32>
    %28 = math.sqrt %27 : vector<16x1xf32>
    %29 = arith.addf %8, %28 : vector<16x1xf32>
    %cst_8 = arith.constant dense<0x7F800000> : vector<32xf32>
    %30 = vector.multi_reduction <minimumf>, %25, %cst_8 [0] : vector<16x32xf32> to vector<32xf32>
    %31 = vector.shape_cast %30 : vector<32xf32> to vector<1x32xf32>
    %32 = arith.minimumf %7, %31 : vector<1x32xf32>
    %33 = vector.extract_strided_slice %2 {offsets = [0, 1], sizes = [16, 1], strides = [1, 1]} : vector<16x24xf32> to vector<16x1xf32>
    %34 = vector.extract_strided_slice %2 {offsets = [0, 5], sizes = [16, 1], strides = [1, 1]} : vector<16x24xf32> to vector<16x1xf32>
    %35 = vector.extract_strided_slice %2 {offsets = [0, 9], sizes = [16, 1], strides = [1, 1]} : vector<16x24xf32> to vector<16x1xf32>
    %36 = vector.broadcast %33 : vector<16x1xf32> to vector<16x32xf32>
    %37 = vector.broadcast %4 : vector<1x32xf32> to vector<16x32xf32>
    %38 = arith.subf %36, %37 : vector<16x32xf32>
    %39 = vector.broadcast %34 : vector<16x1xf32> to vector<16x32xf32>
    %40 = vector.broadcast %5 : vector<1x32xf32> to vector<16x32xf32>
    %41 = arith.subf %39, %40 : vector<16x32xf32>
    %42 = vector.broadcast %35 : vector<16x1xf32> to vector<16x32xf32>
    %43 = vector.broadcast %6 : vector<1x32xf32> to vector<16x32xf32>
    %44 = arith.subf %42, %43 : vector<16x32xf32>
    %45 = arith.mulf %38, %38 : vector<16x32xf32>
    %46 = arith.mulf %41, %41 : vector<16x32xf32>
    %47 = arith.addf %45, %46 : vector<16x32xf32>
    %48 = arith.mulf %44, %44 : vector<16x32xf32>
    %49 = arith.addf %47, %48 : vector<16x32xf32>
    %cst_9 = arith.constant dense<0x7F800000> : vector<16xf32>
    %50 = vector.multi_reduction <minimumf>, %49, %cst_9 [1] : vector<16x32xf32> to vector<16xf32>
    %51 = vector.shape_cast %50 : vector<16xf32> to vector<16x1xf32>
    %52 = math.sqrt %51 : vector<16x1xf32>
    %53 = arith.addf %29, %52 : vector<16x1xf32>
    %cst_10 = arith.constant dense<0x7F800000> : vector<32xf32>
    %54 = vector.multi_reduction <minimumf>, %49, %cst_10 [0] : vector<16x32xf32> to vector<32xf32>
    %55 = vector.shape_cast %54 : vector<32xf32> to vector<1x32xf32>
    %56 = arith.minimumf %32, %55 : vector<1x32xf32>
    %57 = vector.extract_strided_slice %2 {offsets = [0, 2], sizes = [16, 1], strides = [1, 1]} : vector<16x24xf32> to vector<16x1xf32>
    %58 = vector.extract_strided_slice %2 {offsets = [0, 6], sizes = [16, 1], strides = [1, 1]} : vector<16x24xf32> to vector<16x1xf32>
    %59 = vector.extract_strided_slice %2 {offsets = [0, 10], sizes = [16, 1], strides = [1, 1]} : vector<16x24xf32> to vector<16x1xf32>
    %60 = vector.broadcast %57 : vector<16x1xf32> to vector<16x32xf32>
    %61 = vector.broadcast %4 : vector<1x32xf32> to vector<16x32xf32>
    %62 = arith.subf %60, %61 : vector<16x32xf32>
    %63 = vector.broadcast %58 : vector<16x1xf32> to vector<16x32xf32>
    %64 = vector.broadcast %5 : vector<1x32xf32> to vector<16x32xf32>
    %65 = arith.subf %63, %64 : vector<16x32xf32>
    %66 = vector.broadcast %59 : vector<16x1xf32> to vector<16x32xf32>
    %67 = vector.broadcast %6 : vector<1x32xf32> to vector<16x32xf32>
    %68 = arith.subf %66, %67 : vector<16x32xf32>
    %69 = arith.mulf %62, %62 : vector<16x32xf32>
    %70 = arith.mulf %65, %65 : vector<16x32xf32>
    %71 = arith.addf %69, %70 : vector<16x32xf32>
    %72 = arith.mulf %68, %68 : vector<16x32xf32>
    %73 = arith.addf %71, %72 : vector<16x32xf32>
    %cst_11 = arith.constant dense<0x7F800000> : vector<16xf32>
    %74 = vector.multi_reduction <minimumf>, %73, %cst_11 [1] : vector<16x32xf32> to vector<16xf32>
    %75 = vector.shape_cast %74 : vector<16xf32> to vector<16x1xf32>
    %76 = math.sqrt %75 : vector<16x1xf32>
    %77 = arith.addf %53, %76 : vector<16x1xf32>
    %cst_12 = arith.constant dense<0x7F800000> : vector<32xf32>
    %78 = vector.multi_reduction <minimumf>, %73, %cst_12 [0] : vector<16x32xf32> to vector<32xf32>
    %79 = vector.shape_cast %78 : vector<32xf32> to vector<1x32xf32>
    %80 = arith.minimumf %56, %79 : vector<1x32xf32>
    %81 = vector.extract_strided_slice %2 {offsets = [0, 3], sizes = [16, 1], strides = [1, 1]} : vector<16x24xf32> to vector<16x1xf32>
    %82 = vector.extract_strided_slice %2 {offsets = [0, 7], sizes = [16, 1], strides = [1, 1]} : vector<16x24xf32> to vector<16x1xf32>
    %83 = vector.extract_strided_slice %2 {offsets = [0, 11], sizes = [16, 1], strides = [1, 1]} : vector<16x24xf32> to vector<16x1xf32>
    %84 = vector.broadcast %81 : vector<16x1xf32> to vector<16x32xf32>
    %85 = vector.broadcast %4 : vector<1x32xf32> to vector<16x32xf32>
    %86 = arith.subf %84, %85 : vector<16x32xf32>
    %87 = vector.broadcast %82 : vector<16x1xf32> to vector<16x32xf32>
    %88 = vector.broadcast %5 : vector<1x32xf32> to vector<16x32xf32>
    %89 = arith.subf %87, %88 : vector<16x32xf32>
    %90 = vector.broadcast %83 : vector<16x1xf32> to vector<16x32xf32>
    %91 = vector.broadcast %6 : vector<1x32xf32> to vector<16x32xf32>
    %92 = arith.subf %90, %91 : vector<16x32xf32>
    %93 = arith.mulf %86, %86 : vector<16x32xf32>
    %94 = arith.mulf %89, %89 : vector<16x32xf32>
    %95 = arith.addf %93, %94 : vector<16x32xf32>
    %96 = arith.mulf %92, %92 : vector<16x32xf32>
    %97 = arith.addf %95, %96 : vector<16x32xf32>
    %cst_13 = arith.constant dense<0x7F800000> : vector<16xf32>
    %98 = vector.multi_reduction <minimumf>, %97, %cst_13 [1] : vector<16x32xf32> to vector<16xf32>
    %99 = vector.shape_cast %98 : vector<16xf32> to vector<16x1xf32>
    %100 = math.sqrt %99 : vector<16x1xf32>
    %101 = arith.addf %77, %100 : vector<16x1xf32>
    %cst_14 = arith.constant dense<0x7F800000> : vector<32xf32>
    %102 = vector.multi_reduction <minimumf>, %97, %cst_14 [0] : vector<16x32xf32> to vector<32xf32>
    %103 = vector.shape_cast %102 : vector<32xf32> to vector<1x32xf32>
    %104 = arith.minimumf %80, %103 : vector<1x32xf32>
    %105 = vector.shape_cast %101 : vector<16x1xf32> to vector<1x16x1xf32>
    %cst_15 = arith.constant dense<0.000000e+00> : vector<1xf32>
    %106 = vector.multi_reduction <add>, %105, %cst_15 [1, 2] : vector<1x16x1xf32> to vector<1xf32>
    %107 = vector.shape_cast %106 : vector<1xf32> to vector<1x1x1xf32>
    %108 = vector.extract %107[0, 0, 0] : f32 from vector<1x1x1xf32>
    %cst_16 = arith.constant 6.400000e+01 : f32
    %109 = arith.divf %108, %cst_16 : f32
    %110 = math.sqrt %104 : vector<1x32xf32>
    %111 = vector.shape_cast %110 : vector<1x32xf32> to vector<1x1x32xf32>
    %cst_17 = arith.constant dense<0.000000e+00> : vector<1xf32>
    %112 = vector.multi_reduction <add>, %111, %cst_17 [1, 2] : vector<1x1x32xf32> to vector<1xf32>
    %113 = vector.shape_cast %112 : vector<1xf32> to vector<1x1x1xf32>
    %114 = vector.extract %113[0, 0, 0] : f32 from vector<1x1x1xf32>
    %cst_18 = arith.constant 3.200000e+01 : f32
    %115 = arith.divf %114, %cst_18 : f32
    %116 = arith.addf %115, %109 : f32
    %cst_19 = arith.constant 1.000000e-01 : f32
    %117 = arith.mulf %116, %cst_19 : f32
    %c0_20 = arith.constant 0 : index
    %118 = memref.load %arg3[%c0_20] : memref<2xf32, #tpu.memory_space<smem>>
    memref.store %117, %arg3[%c0_20] : memref<2xf32, #tpu.memory_space<smem>>
    %119 = vector.extract_strided_slice %3 {offsets = [0, 32], sizes = [1, 32], strides = [1, 1]} : vector<3x64xf32> to vector<1x32xf32>
    %120 = vector.extract_strided_slice %3 {offsets = [1, 32], sizes = [1, 32], strides = [1, 1]} : vector<3x64xf32> to vector<1x32xf32>
    %121 = vector.extract_strided_slice %3 {offsets = [2, 32], sizes = [1, 32], strides = [1, 1]} : vector<3x64xf32> to vector<1x32xf32>
    %cst_21 = arith.constant 0x7F800000 : f32
    %122 = vector.broadcast %cst_21 : f32 to vector<1x32xf32>
    %cst_22 = arith.constant 0.000000e+00 : f32
    %123 = vector.broadcast %cst_22 : f32 to vector<16x1xf32>
    %124 = vector.extract_strided_slice %2 {offsets = [0, 12], sizes = [16, 1], strides = [1, 1]} : vector<16x24xf32> to vector<16x1xf32>
    %125 = vector.extract_strided_slice %2 {offsets = [0, 16], sizes = [16, 1], strides = [1, 1]} : vector<16x24xf32> to vector<16x1xf32>
    %126 = vector.extract_strided_slice %2 {offsets = [0, 20], sizes = [16, 1], strides = [1, 1]} : vector<16x24xf32> to vector<16x1xf32>
    %127 = vector.broadcast %124 : vector<16x1xf32> to vector<16x32xf32>
    %128 = vector.broadcast %119 : vector<1x32xf32> to vector<16x32xf32>
    %129 = arith.subf %127, %128 : vector<16x32xf32>
    %130 = vector.broadcast %125 : vector<16x1xf32> to vector<16x32xf32>
    %131 = vector.broadcast %120 : vector<1x32xf32> to vector<16x32xf32>
    %132 = arith.subf %130, %131 : vector<16x32xf32>
    %133 = vector.broadcast %126 : vector<16x1xf32> to vector<16x32xf32>
    %134 = vector.broadcast %121 : vector<1x32xf32> to vector<16x32xf32>
    %135 = arith.subf %133, %134 : vector<16x32xf32>
    %136 = arith.mulf %129, %129 : vector<16x32xf32>
    %137 = arith.mulf %132, %132 : vector<16x32xf32>
    %138 = arith.addf %136, %137 : vector<16x32xf32>
    %139 = arith.mulf %135, %135 : vector<16x32xf32>
    %140 = arith.addf %138, %139 : vector<16x32xf32>
    %cst_23 = arith.constant dense<0x7F800000> : vector<16xf32>
    %141 = vector.multi_reduction <minimumf>, %140, %cst_23 [1] : vector<16x32xf32> to vector<16xf32>
    %142 = vector.shape_cast %141 : vector<16xf32> to vector<16x1xf32>
    %143 = math.sqrt %142 : vector<16x1xf32>
    %144 = arith.addf %123, %143 : vector<16x1xf32>
    %cst_24 = arith.constant dense<0x7F800000> : vector<32xf32>
    %145 = vector.multi_reduction <minimumf>, %140, %cst_24 [0] : vector<16x32xf32> to vector<32xf32>
    %146 = vector.shape_cast %145 : vector<32xf32> to vector<1x32xf32>
    %147 = arith.minimumf %122, %146 : vector<1x32xf32>
    %148 = vector.extract_strided_slice %2 {offsets = [0, 13], sizes = [16, 1], strides = [1, 1]} : vector<16x24xf32> to vector<16x1xf32>
    %149 = vector.extract_strided_slice %2 {offsets = [0, 17], sizes = [16, 1], strides = [1, 1]} : vector<16x24xf32> to vector<16x1xf32>
    %150 = vector.extract_strided_slice %2 {offsets = [0, 21], sizes = [16, 1], strides = [1, 1]} : vector<16x24xf32> to vector<16x1xf32>
    %151 = vector.broadcast %148 : vector<16x1xf32> to vector<16x32xf32>
    %152 = vector.broadcast %119 : vector<1x32xf32> to vector<16x32xf32>
    %153 = arith.subf %151, %152 : vector<16x32xf32>
    %154 = vector.broadcast %149 : vector<16x1xf32> to vector<16x32xf32>
    %155 = vector.broadcast %120 : vector<1x32xf32> to vector<16x32xf32>
    %156 = arith.subf %154, %155 : vector<16x32xf32>
    %157 = vector.broadcast %150 : vector<16x1xf32> to vector<16x32xf32>
    %158 = vector.broadcast %121 : vector<1x32xf32> to vector<16x32xf32>
    %159 = arith.subf %157, %158 : vector<16x32xf32>
    %160 = arith.mulf %153, %153 : vector<16x32xf32>
    %161 = arith.mulf %156, %156 : vector<16x32xf32>
    %162 = arith.addf %160, %161 : vector<16x32xf32>
    %163 = arith.mulf %159, %159 : vector<16x32xf32>
    %164 = arith.addf %162, %163 : vector<16x32xf32>
    %cst_25 = arith.constant dense<0x7F800000> : vector<16xf32>
    %165 = vector.multi_reduction <minimumf>, %164, %cst_25 [1] : vector<16x32xf32> to vector<16xf32>
    %166 = vector.shape_cast %165 : vector<16xf32> to vector<16x1xf32>
    %167 = math.sqrt %166 : vector<16x1xf32>
    %168 = arith.addf %144, %167 : vector<16x1xf32>
    %cst_26 = arith.constant dense<0x7F800000> : vector<32xf32>
    %169 = vector.multi_reduction <minimumf>, %164, %cst_26 [0] : vector<16x32xf32> to vector<32xf32>
    %170 = vector.shape_cast %169 : vector<32xf32> to vector<1x32xf32>
    %171 = arith.minimumf %147, %170 : vector<1x32xf32>
    %172 = vector.extract_strided_slice %2 {offsets = [0, 14], sizes = [16, 1], strides = [1, 1]} : vector<16x24xf32> to vector<16x1xf32>
    %173 = vector.extract_strided_slice %2 {offsets = [0, 18], sizes = [16, 1], strides = [1, 1]} : vector<16x24xf32> to vector<16x1xf32>
    %174 = vector.extract_strided_slice %2 {offsets = [0, 22], sizes = [16, 1], strides = [1, 1]} : vector<16x24xf32> to vector<16x1xf32>
    %175 = vector.broadcast %172 : vector<16x1xf32> to vector<16x32xf32>
    %176 = vector.broadcast %119 : vector<1x32xf32> to vector<16x32xf32>
    %177 = arith.subf %175, %176 : vector<16x32xf32>
    %178 = vector.broadcast %173 : vector<16x1xf32> to vector<16x32xf32>
    %179 = vector.broadcast %120 : vector<1x32xf32> to vector<16x32xf32>
    %180 = arith.subf %178, %179 : vector<16x32xf32>
    %181 = vector.broadcast %174 : vector<16x1xf32> to vector<16x32xf32>
    %182 = vector.broadcast %121 : vector<1x32xf32> to vector<16x32xf32>
    %183 = arith.subf %181, %182 : vector<16x32xf32>
    %184 = arith.mulf %177, %177 : vector<16x32xf32>
    %185 = arith.mulf %180, %180 : vector<16x32xf32>
    %186 = arith.addf %184, %185 : vector<16x32xf32>
    %187 = arith.mulf %183, %183 : vector<16x32xf32>
    %188 = arith.addf %186, %187 : vector<16x32xf32>
    %cst_27 = arith.constant dense<0x7F800000> : vector<16xf32>
    %189 = vector.multi_reduction <minimumf>, %188, %cst_27 [1] : vector<16x32xf32> to vector<16xf32>
    %190 = vector.shape_cast %189 : vector<16xf32> to vector<16x1xf32>
    %191 = math.sqrt %190 : vector<16x1xf32>
    %192 = arith.addf %168, %191 : vector<16x1xf32>
    %cst_28 = arith.constant dense<0x7F800000> : vector<32xf32>
    %193 = vector.multi_reduction <minimumf>, %188, %cst_28 [0] : vector<16x32xf32> to vector<32xf32>
    %194 = vector.shape_cast %193 : vector<32xf32> to vector<1x32xf32>
    %195 = arith.minimumf %171, %194 : vector<1x32xf32>
    %196 = vector.extract_strided_slice %2 {offsets = [0, 15], sizes = [16, 1], strides = [1, 1]} : vector<16x24xf32> to vector<16x1xf32>
    %197 = vector.extract_strided_slice %2 {offsets = [0, 19], sizes = [16, 1], strides = [1, 1]} : vector<16x24xf32> to vector<16x1xf32>
    %198 = vector.extract_strided_slice %2 {offsets = [0, 23], sizes = [16, 1], strides = [1, 1]} : vector<16x24xf32> to vector<16x1xf32>
    %199 = vector.broadcast %196 : vector<16x1xf32> to vector<16x32xf32>
    %200 = vector.broadcast %119 : vector<1x32xf32> to vector<16x32xf32>
    %201 = arith.subf %199, %200 : vector<16x32xf32>
    %202 = vector.broadcast %197 : vector<16x1xf32> to vector<16x32xf32>
    %203 = vector.broadcast %120 : vector<1x32xf32> to vector<16x32xf32>
    %204 = arith.subf %202, %203 : vector<16x32xf32>
    %205 = vector.broadcast %198 : vector<16x1xf32> to vector<16x32xf32>
    %206 = vector.broadcast %121 : vector<1x32xf32> to vector<16x32xf32>
    %207 = arith.subf %205, %206 : vector<16x32xf32>
    %208 = arith.mulf %201, %201 : vector<16x32xf32>
    %209 = arith.mulf %204, %204 : vector<16x32xf32>
    %210 = arith.addf %208, %209 : vector<16x32xf32>
    %211 = arith.mulf %207, %207 : vector<16x32xf32>
    %212 = arith.addf %210, %211 : vector<16x32xf32>
    %cst_29 = arith.constant dense<0x7F800000> : vector<16xf32>
    %213 = vector.multi_reduction <minimumf>, %212, %cst_29 [1] : vector<16x32xf32> to vector<16xf32>
    %214 = vector.shape_cast %213 : vector<16xf32> to vector<16x1xf32>
    %215 = math.sqrt %214 : vector<16x1xf32>
    %216 = arith.addf %192, %215 : vector<16x1xf32>
    %cst_30 = arith.constant dense<0x7F800000> : vector<32xf32>
    %217 = vector.multi_reduction <minimumf>, %212, %cst_30 [0] : vector<16x32xf32> to vector<32xf32>
    %218 = vector.shape_cast %217 : vector<32xf32> to vector<1x32xf32>
    %219 = arith.minimumf %195, %218 : vector<1x32xf32>
    %220 = vector.shape_cast %216 : vector<16x1xf32> to vector<1x16x1xf32>
    %cst_31 = arith.constant dense<0.000000e+00> : vector<1xf32>
    %221 = vector.multi_reduction <add>, %220, %cst_31 [1, 2] : vector<1x16x1xf32> to vector<1xf32>
    %222 = vector.shape_cast %221 : vector<1xf32> to vector<1x1x1xf32>
    %223 = vector.extract %222[0, 0, 0] : f32 from vector<1x1x1xf32>
    %cst_32 = arith.constant 6.400000e+01 : f32
    %224 = arith.divf %223, %cst_32 : f32
    %225 = math.sqrt %219 : vector<1x32xf32>
    %226 = vector.shape_cast %225 : vector<1x32xf32> to vector<1x1x32xf32>
    %cst_33 = arith.constant dense<0.000000e+00> : vector<1xf32>
    %227 = vector.multi_reduction <add>, %226, %cst_33 [1, 2] : vector<1x1x32xf32> to vector<1xf32>
    %228 = vector.shape_cast %227 : vector<1xf32> to vector<1x1x1xf32>
    %229 = vector.extract %228[0, 0, 0] : f32 from vector<1x1x1xf32>
    %cst_34 = arith.constant 3.200000e+01 : f32
    %230 = arith.divf %229, %cst_34 : f32
    %231 = arith.addf %230, %224 : f32
    %cst_35 = arith.constant 1.000000e-01 : f32
    %232 = arith.mulf %231, %cst_35 : f32
    %c1 = arith.constant 1 : index
    %233 = memref.load %arg3[%c1] : memref<2xf32, #tpu.memory_space<smem>>
    memref.store %232, %arg3[%c1] : memref<2xf32, #tpu.memory_space<smem>>
    return
  }
}

</mosaic_0001>

<llo_original>
// kernel: tpu_custom_call.1
$region0: #{tpu_custom_call.1}
  #allocation0 [shape = 'u32[]', space=smem, size = 0x4, offset = 0x4, fixed_abs, tag = 'smem constant byte address 0x4 - core index']
  #allocation1 [shape = 'u32[144,128]{1,0:T(1,128)}', space=vmem, size = 0x12000, scoped, tag = 'internal scratch']
  %s0 = inlined_call_operand.vmem [shape: f32[16,4], index: 0, kind: input, shape index: {}]
  %s1 = inlined_call_operand.vmem [shape: f32[3,64], index: 1, kind: input, shape index: {}]
  %s2 = inlined_call_operand.vmem [shape: f32[4,24], index: 2, kind: input, shape index: {}]
  %s3 = inlined_call_operand.hbm [shape: f32[2], index: 3, kind: output, shape index: {}]
  %s4 = sld [smem:[#allocation0]]
  $region22: #{tpu_custom_call.1} parent=0
    _
  %s6 = ssub.s32 1, %s4
  %s7 = scalar_select 0, %s6, %s4
  $region1: #{tpu_custom_call.1} parent=0
    #allocation2 [shape = 'u8[512]{0}', space=smem, size = 0x200, scoped, tag = 'output window, operand 0, single buffered']
    #allocation3 [shape = 's32[1]{0}', space=sflag, size = 0x4, scoped, tag = 'scoped memory for tpu_custom_call.1']
    %8 = vsyncpa [#allocation3], 0
    // Predicated region
    $region2: #{tpu_custom_call.1} parent=1 // pred_check
      _
    $region3: #{tpu_custom_call.1} parent=1 // pred_check_branch
      %10 = sbr.rel (0) target = $region5
    $region4: #{tpu_custom_call.1} parent=1 // pred_region
      _
    $region5: #{tpu_custom_call.1} parent=1 // pred_fallthru
      _
    // Predicated region
    $region6: #{tpu_custom_call.1} parent=1 // pred_check
      _
    $region7: #{tpu_custom_call.1} parent=1 // pred_check_branch
      %12 = sbr.rel (0) target = $region9
    $region8: #{tpu_custom_call.1} parent=1 // pred_region
      _
    $region9: #{tpu_custom_call.1} parent=1 // pred_fallthru
      _
    // Predicated region
    $region10: #{tpu_custom_call.1} parent=1 // pred_check
      _
    $region11: #{tpu_custom_call.1} parent=1 // pred_check_branch
      %14 = sbr.rel (0) target = $region13
    $region12: #{tpu_custom_call.1} parent=1 // pred_region
      _
    $region13: #{tpu_custom_call.1} parent=1 // pred_fallthru
      _
    %v15 = vld [vmem:[%s0] sm:$0xff]
    %v16 = vld [vmem:[%s0 + $0x8] sm:$0xff]
    %v17 = vld [vmem:[%s2] sm:$0xf]
    %vm18 = vcmask 31744
    %v20 = vsel %vm18, %v15, 0
    %v23 = vsel %vm18, %v16, 0
    %vm25 = vcmask 1043456
    %v27 = vsel %vm25, %v17, 0
    %29 = vmatprep.subr.mxu0 0.0
    %30 = vmatpush1.msra.mxu0 0.0
    %31 = vmatprep.subr.mxu0 0.0
    %32 = vmatpush1.msra.mxu0 0.0
    %33 = vmatprep.subr.mxu0 0.0
    %34 = vmatpush1.msra.mxu0 0.0
    %35 = vmatprep.subr.mxu0 0.0
    %36 = vmatpush1.msra.mxu0 0.0
    %37 = vmatprep.subr.mxu0 0.0
    %38 = vmatpush1.msra.mxu0 0.0
    %39 = vmatprep.subr.mxu0 0.0
    %40 = vmatpush1.msra.mxu0 0.0
    %41 = vmatprep.subr.mxu0 0.0
    %42 = vmatpush1.msra.mxu0 0.0
    %43 = vmatprep.subr.mxu0 0.0
    %44 = vmatpush1.msra.mxu0 0.0
    %45 = vmatprep.subr.mxu0 0.0
    %46 = vmatpush1.msra.mxu0 0.0
    %47 = vmatprep.subr.mxu0 0.0
    %48 = vmatpush1.msra.mxu0 0.0
    %49 = vmatprep.subr.mxu0 0.0
    %50 = vmatpush1.msra.mxu0 0.0
    %51 = vmatprep.subr.mxu0 0.0
    %52 = vmatpush1.msra.mxu0 0.0
    %53 = vmatprep.subr.mxu0 0.0
    %54 = vmatpush1.msra.mxu0 0.0
    %55 = vmatprep.subr.mxu0 0.0
    %56 = vmatpush1.msra.mxu0 0.0
    %57 = vmatprep.subr.mxu0 0.0
    %58 = vmatpush1.msra.mxu0 0.0
    %59 = vmatprep.subr.mxu0 0.0
    %60 = vmatpush1.msra.mxu0 %v27
    %61 = vmatprep.subr.mxu0 0.0
    %62 = vmatpush2.msra.mxu0 0.0
    %63 = vmatprep.subr.mxu0 0.0
    %64 = vmatpush2.msra.mxu0 0.0
    %65 = vmatprep.subr.mxu0 0.0
    %66 = vmatpush2.msra.mxu0 0.0
    %67 = vmatprep.subr.mxu0 0.0
    %68 = vmatpush2.msra.mxu0 0.0
    %69 = vmatprep.subr.mxu0 0.0
    %70 = vmatpush2.msra.mxu0 0.0
    %71 = vmatprep.subr.mxu0 0.0
    %72 = vmatpush2.msra.mxu0 0.0
    %73 = vmatprep.subr.mxu0 0.0
    %74 = vmatpush2.msra.mxu0 0.0
    %75 = vmatprep.subr.mxu0 0.0
    %76 = vmatpush2.msra.mxu0 0.0
    %77 = vmatprep.subr.mxu0 0.0
    %78 = vmatpush2.msra.mxu0 0.0
    %79 = vmatprep.subr.mxu0 0.0
    %80 = vmatpush2.msra.mxu0 0.0
    %81 = vmatprep.subr.mxu0 0.0
    %82 = vmatpush2.msra.mxu0 0.0
    %83 = vmatprep.subr.mxu0 0.0
    %84 = vmatpush2.msra.mxu0 0.0
    %85 = vmatprep.subr.mxu0 0.0
    %86 = vmatpush2.msra.mxu0 0.0
    %87 = vmatprep.subr.mxu0 0.0
    %88 = vmatpush2.msra.mxu0 0.0
    %89 = vmatprep.subr.mxu0 0.0
    %90 = vmatpush2.msra.mxu0 0.0
    %91 = vmatprep.subr.mxu0 0.0
    %92 = vmatpush2.msra.mxu0 0.0
    %93 = vmatprep.mubr.f32.mxu0 0.0
    %94 = vmatmul.mubr.f32.gmra.mxu0 %v20
    %v95 = vpop.f32.mrf.mxu0
    %v96 = vadd.f32 0.0, %v95
    %v97 = vpop.f32.mrf.mxu0
    %98 = vmatprep.mubr.f32.mxu0 0.0
    %99 = vmatmul.mubr.f32.gmra.mxu0 %v23
    %v100 = vpop.f32.mrf.mxu0
    %v101 = vadd.f32 0.0, %v100
    %v102 = vpop.f32.mrf.mxu0
    %103 = vdwg.mxu0
    %v104 = vld [vmem:[%s1] sm:$0x7]
    %106 = vset.pattern.permute.xlu0 0
    %107 = vperm.xlu0 %106, %v96
    %v108 = vpop.permute.xlu0 %107
    %111 = vset.pattern.permute.xlu0 0
    %112 = vperm.xlu0 %111, %v101
    %v113 = vpop.permute.xlu0 %112
    %v115 = vlaneseq
    %v116 = vshrl.u32 %v115, 7
    %v117 = vsub.s32 0, %v116
    %v118 = vrot.slane %v104, %v117
    %v119 = vsub.f32 %v108, %v118
    %v120 = vsub.f32 %v113, %v118
    %121 = vset.pattern.permute.xlu0 4
    %122 = vperm.xlu0 %121, %v96
    %v123 = vpop.permute.xlu0 %122
    %125 = vset.pattern.permute.xlu0 4
    %126 = vperm.xlu0 %125, %v101
    %v127 = vpop.permute.xlu0 %126
    %v129 = vlaneseq
    %v130 = vshrl.u32 %v129, 7
    %v131 = vsub.s32 1, %v130
    %v132 = vrot.slane %v104, %v131
    %v133 = vsub.f32 %v123, %v132
    %v134 = vsub.f32 %v127, %v132
    %135 = vset.pattern.permute.xlu0 8
    %136 = vperm.xlu0 %135, %v96
    %v137 = vpop.permute.xlu0 %136
    %139 = vset.pattern.permute.xlu0 8
    %140 = vperm.xlu0 %139, %v101
    %v141 = vpop.permute.xlu0 %140
    %v143 = vlaneseq
    %v144 = vshrl.u32 %v143, 7
    %v145 = vsub.s32 2, %v144
    %v146 = vrot.slane %v104, %v145
    %v147 = vsub.f32 %v137, %v146
    %v148 = vsub.f32 %v141, %v146
    %v149 = vmul.f32 %v119, %v119
    %v150 = vmul.f32 %v120, %v120
    %v151 = vmul.f32 %v133, %v133
    %v152 = vmul.f32 %v134, %v134
    %v153 = vadd.f32 %v149, %v151
    %v154 = vadd.f32 %v150, %v152
    %v155 = vmul.f32 %v147, %v147
    %v156 = vmul.f32 %v148, %v148
    %v157 = vadd.f32 %v153, %v155
    %v158 = vadd.f32 %v154, %v156
    %vm159 = vcmask 261120
    %v160 = vsel %vm159, %v157, inf
    %161 = vmin.xlane.f32.xlu0 %v160
    %v162 = vpop.xlane.xlu0 %161
    %v163 = vsel %vm159, %v158, inf
    %164 = vmin.xlane.f32.xlu0 %v163
    %v165 = vpop.xlane.xlu0 %164
    %v166 = vrsqrt.pop %v162
    %v167 = vmul.f32 %v162, %v166
    %vm168 = vcmp.eq.f32.partialorder %v162, inf
    %v169 = vsel %vm168, %v162, %v167
    %vm170 = vcmp.eq.f32.partialorder %v162, 0.0
    %v171 = vand.u32 %v162, 2147483648
    %v172 = vsel %vm170, %v171, %v169
    %v173 = vrsqrt.pop %v165
    %v174 = vmul.f32 %v165, %v173
    %vm175 = vcmp.eq.f32.partialorder %v165, inf
    %v176 = vsel %vm175, %v165, %v174
    %vm177 = vcmp.eq.f32.partialorder %v165, 0.0
    %v178 = vand.u32 %v165, 2147483648
    %v179 = vsel %vm177, %v178, %v176
    %v180 = vadd.f32 %v172, 0.0
    %v181 = vadd.f32 %v179, 0.0
    %v182 = vmin.f32 %v160, %v163
    %v183 = vrot.slane %v182, 4
    %v184 = vmin.f32 %v182, %v183
    %v185 = vrot.slane %v184, 2
    %v186 = vmin.f32 %v184, %v185
    %v187 = vrot.slane %v186, 1
    %v188 = vmin.f32 %v186, %v187
    %189 = vset.pattern.permute.xlu0 1
    %190 = vperm.xlu0 %189, %v96
    %v191 = vpop.permute.xlu0 %190
    %193 = vset.pattern.permute.xlu0 1
    %194 = vperm.xlu0 %193, %v101
    %v195 = vpop.permute.xlu0 %194
    %v197 = vsub.f32 %v191, %v118
    %v198 = vsub.f32 %v195, %v118
    %199 = vset.pattern.permute.xlu0 5
    %200 = vperm.xlu0 %199, %v96
    %v201 = vpop.permute.xlu0 %200
    %203 = vset.pattern.permute.xlu0 5
    %204 = vperm.xlu0 %203, %v101
    %v205 = vpop.permute.xlu0 %204
    %v207 = vsub.f32 %v201, %v132
    %v208 = vsub.f32 %v205, %v132
    %209 = vset.pattern.permute.xlu0 9
    %210 = vperm.xlu0 %209, %v96
    %v211 = vpop.permute.xlu0 %210
    %213 = vset.pattern.permute.xlu0 9
    %214 = vperm.xlu0 %213, %v101
    %v215 = vpop.permute.xlu0 %214
    %v217 = vsub.f32 %v211, %v146
    %v218 = vsub.f32 %v215, %v146
    %v219 = vmul.f32 %v197, %v197
    %v220 = vmul.f32 %v198, %v198
    %v221 = vmul.f32 %v207, %v207
    %v222 = vmul.f32 %v208, %v208
    %v223 = vadd.f32 %v219, %v221
    %v224 = vadd.f32 %v220, %v222
    %v225 = vmul.f32 %v217, %v217
    %v226 = vmul.f32 %v218, %v218
    %v227 = vadd.f32 %v223, %v225
    %v228 = vadd.f32 %v224, %v226
    %v229 = vsel %vm159, %v227, inf
    %230 = vmin.xlane.f32.xlu0 %v229
    %v231 = vpop.xlane.xlu0 %230
    %v232 = vsel %vm159, %v228, inf
    %233 = vmin.xlane.f32.xlu0 %v232
    %v234 = vpop.xlane.xlu0 %233
    %v235 = vrsqrt.pop %v231
    %v236 = vmul.f32 %v231, %v235
    %vm237 = vcmp.eq.f32.partialorder %v231, inf
    %v238 = vsel %vm237, %v231, %v236
    %vm239 = vcmp.eq.f32.partialorder %v231, 0.0
    %v240 = vand.u32 %v231, 2147483648
    %v241 = vsel %vm239, %v240, %v238
    %v242 = vrsqrt.pop %v234
    %v243 = vmul.f32 %v234, %v242
    %vm244 = vcmp.eq.f32.partialorder %v234, inf
    %v245 = vsel %vm244, %v234, %v243
    %vm246 = vcmp.eq.f32.partialorder %v234, 0.0
    %v247 = vand.u32 %v234, 2147483648
    %v248 = vsel %vm246, %v247, %v245
    %v249 = vadd.f32 %v180, %v241
    %v250 = vadd.f32 %v181, %v248
    %v251 = vmin.f32 %v229, %v232
    %v252 = vrot.slane %v251, 4
    %v253 = vmin.f32 %v251, %v252
    %v254 = vrot.slane %v253, 2
    %v255 = vmin.f32 %v253, %v254
    %v256 = vrot.slane %v255, 1
    %v257 = vmin.f32 %v255, %v256
    %v258 = vmin.f32 %v188, %v257
    %259 = vset.pattern.permute.xlu0 2
    %260 = vperm.xlu0 %259, %v96
    %v261 = vpop.permute.xlu0 %260
    %263 = vset.pattern.permute.xlu0 2
    %264 = vperm.xlu0 %263, %v101
    %v265 = vpop.permute.xlu0 %264
    %v267 = vsub.f32 %v261, %v118
    %v268 = vsub.f32 %v265, %v118
    %269 = vset.pattern.permute.xlu0 6
    %270 = vperm.xlu0 %269, %v96
    %v271 = vpop.permute.xlu0 %270
    %273 = vset.pattern.permute.xlu0 6
    %274 = vperm.xlu0 %273, %v101
    %v275 = vpop.permute.xlu0 %274
    %v277 = vsub.f32 %v271, %v132
    %v278 = vsub.f32 %v275, %v132
    %279 = vset.pattern.permute.xlu0 10
    %280 = vperm.xlu0 %279, %v96
    %v281 = vpop.permute.xlu0 %280
    %283 = vset.pattern.permute.xlu0 10
    %284 = vperm.xlu0 %283, %v101
    %v285 = vpop.permute.xlu0 %284
    %v287 = vsub.f32 %v281, %v146
    %v288 = vsub.f32 %v285, %v146
    %v289 = vmul.f32 %v267, %v267
    %v290 = vmul.f32 %v268, %v268
    %v291 = vmul.f32 %v277, %v277
    %v292 = vmul.f32 %v278, %v278
    %v293 = vadd.f32 %v289, %v291
    %v294 = vadd.f32 %v290, %v292
    %v295 = vmul.f32 %v287, %v287
    %v296 = vmul.f32 %v288, %v288
    %v297 = vadd.f32 %v293, %v295
    %v298 = vadd.f32 %v294, %v296
    %v299 = vsel %vm159, %v297, inf
    %300 = vmin.xlane.f32.xlu0 %v299
    %v301 = vpop.xlane.xlu0 %300
    %v302 = vsel %vm159, %v298, inf
    %303 = vmin.xlane.f32.xlu0 %v302
    %v304 = vpop.xlane.xlu0 %303
    %v305 = vrsqrt.pop %v301
    %v306 = vmul.f32 %v301, %v305
    %vm307 = vcmp.eq.f32.partialorder %v301, inf
    %v308 = vsel %vm307, %v301, %v306
    %vm309 = vcmp.eq.f32.partialorder %v301, 0.0
    %v310 = vand.u32 %v301, 2147483648
    %v311 = vsel %vm309, %v310, %v308
    %v312 = vrsqrt.pop %v304
    %v313 = vmul.f32 %v304, %v312
    %vm314 = vcmp.eq.f32.partialorder %v304, inf
    %v315 = vsel %vm314, %v304, %v313
    %vm316 = vcmp.eq.f32.partialorder %v304, 0.0
    %v317 = vand.u32 %v304, 2147483648
    %v318 = vsel %vm316, %v317, %v315
    %v319 = vadd.f32 %v249, %v311
    %v320 = vadd.f32 %v250, %v318
    %v321 = vmin.f32 %v299, %v302
    %v322 = vrot.slane %v321, 4
    %v323 = vmin.f32 %v321, %v322
    %v324 = vrot.slane %v323, 2
    %v325 = vmin.f32 %v323, %v324
    %v326 = vrot.slane %v325, 1
    %v327 = vmin.f32 %v325, %v326
    %v328 = vmin.f32 %v258, %v327
    %329 = vset.pattern.permute.xlu0 3
    %330 = vperm.xlu0 %329, %v96
    %v331 = vpop.permute.xlu0 %330
    %333 = vset.pattern.permute.xlu0 3
    %334 = vperm.xlu0 %333, %v101
    %v335 = vpop.permute.xlu0 %334
    %v337 = vsub.f32 %v331, %v118
    %v338 = vsub.f32 %v335, %v118
    %339 = vset.pattern.permute.xlu0 7
    %340 = vperm.xlu0 %339, %v96
    %v341 = vpop.permute.xlu0 %340
    %343 = vset.pattern.permute.xlu0 7
    %344 = vperm.xlu0 %343, %v101
    %v345 = vpop.permute.xlu0 %344
    %v347 = vsub.f32 %v341, %v132
    %v348 = vsub.f32 %v345, %v132
    %349 = vset.pattern.permute.xlu0 11
    %350 = vperm.xlu0 %349, %v96
    %v351 = vpop.permute.xlu0 %350
    %353 = vset.pattern.permute.xlu0 11
    %354 = vperm.xlu0 %353, %v101
    %v355 = vpop.permute.xlu0 %354
    %v357 = vsub.f32 %v351, %v146
    %v358 = vsub.f32 %v355, %v146
    %v359 = vmul.f32 %v337, %v337
    %v360 = vmul.f32 %v338, %v338
    %v361 = vmul.f32 %v347, %v347
    %v362 = vmul.f32 %v348, %v348
    %v363 = vadd.f32 %v359, %v361
    %v364 = vadd.f32 %v360, %v362
    %v365 = vmul.f32 %v357, %v357
    %v366 = vmul.f32 %v358, %v358
    %v367 = vadd.f32 %v363, %v365
    %v368 = vadd.f32 %v364, %v366
    %v369 = vsel %vm159, %v367, inf
    %370 = vmin.xlane.f32.xlu0 %v369
    %v371 = vpop.xlane.xlu0 %370
    %v372 = vsel %vm159, %v368, inf
    %373 = vmin.xlane.f32.xlu0 %v372
    %v374 = vpop.xlane.xlu0 %373
    %v375 = vrsqrt.pop %v371
    %v376 = vmul.f32 %v371, %v375
    %vm377 = vcmp.eq.f32.partialorder %v371, inf
    %v378 = vsel %vm377, %v371, %v376
    %vm379 = vcmp.eq.f32.partialorder %v371, 0.0
    %v380 = vand.u32 %v371, 2147483648
    %v381 = vsel %vm379, %v380, %v378
    %v382 = vrsqrt.pop %v374
    %v383 = vmul.f32 %v374, %v382
    %vm384 = vcmp.eq.f32.partialorder %v374, inf
    %v385 = vsel %vm384, %v374, %v383
    %vm386 = vcmp.eq.f32.partialorder %v374, 0.0
    %v387 = vand.u32 %v374, 2147483648
    %v388 = vsel %vm386, %v387, %v385
    %v389 = vadd.f32 %v319, %v381
    %v390 = vadd.f32 %v320, %v388
    %v391 = vmin.f32 %v369, %v372
    %v392 = vrot.slane %v391, 4
    %v393 = vmin.f32 %v391, %v392
    %v394 = vrot.slane %v393, 2
    %v395 = vmin.f32 %v393, %v394
    %v396 = vrot.slane %v395, 1
    %v397 = vmin.f32 %v395, %v396
    %v398 = vmin.f32 %v328, %v397
    %vm399 = vcmask 7168
    %v400 = vsel %vm399, %v389, 0.0
    %v401 = vsel %vm399, %v390, 0.0
    %v402 = vadd.f32 %v400, %v401
    %403 = vadd.xlane.f32.xlu0 %v402
    %v404 = vpop.xlane.xlu0 %403
    %v405 = vrot.slane %v404, 4
    %v406 = vadd.f32 %v404, %v405
    %v407 = vrot.slane %v406, 2
    %v408 = vadd.f32 %v406, %v407
    %v409 = vrot.slane %v408, 1
    %v410 = vadd.f32 %v408, %v409
    %s411 = vtos %v410
    %v412 = vrcp.pop 64.0
    %s413 = vtos %v412
    %s414 = smul.f32 %s411, %s413
    %v415 = vrsqrt.pop %v398
    %v416 = vmul.f32 %v398, %v415
    %vm417 = vcmp.eq.f32.partialorder %v398, inf
    %v418 = vsel %vm417, %v398, %v416
    %vm419 = vcmp.eq.f32.partialorder %v398, 0.0
    %v420 = vand.u32 %v398, 2147483648
    %v421 = vsel %vm419, %v420, %v418
    %vm422 = vcmask 253952
    %v423 = vsel %vm422, %v421, 0.0
    %424 = vadd.xlane.f32.xlu0 %v423
    %v425 = vpop.xlane.xlu0 %424
    %v426 = vrot.slane %v425, 4
    %v427 = vadd.f32 %v425, %v426
    %v428 = vrot.slane %v427, 2
    %v429 = vadd.f32 %v427, %v428
    %v430 = vrot.slane %v429, 1
    %v431 = vadd.f32 %v429, %v430
    %s432 = vtos %v431
    %v433 = vrcp.pop 32.0
    %s434 = vtos %v433
    %s435 = smul.f32 %s432, %s434
    %s436 = sadd.f32 %s435, %s414
    %s437 = smul.f32 %s436, 0.1
    %s438 = scalar_lea.smem [#allocation2], 0
    %439 = sst [smem:[%s438]] %s437
    %440 = vset.pattern.permute.xlu0 12
    %441 = vperm.xlu0 %440, %v96
    %v442 = vpop.permute.xlu0 %441
    %444 = vset.pattern.permute.xlu0 12
    %445 = vperm.xlu0 %444, %v101
    %v446 = vpop.permute.xlu0 %445
    %v448 = vsub.f32 %v442, %v118
    %v449 = vsub.f32 %v446, %v118
    %450 = vset.pattern.permute.xlu0 16
    %451 = vperm.xlu0 %450, %v96
    %v452 = vpop.permute.xlu0 %451
    %454 = vset.pattern.permute.xlu0 16
    %455 = vperm.xlu0 %454, %v101
    %v456 = vpop.permute.xlu0 %455
    %v458 = vsub.f32 %v452, %v132
    %v459 = vsub.f32 %v456, %v132
    %460 = vset.pattern.permute.xlu0 20
    %461 = vperm.xlu0 %460, %v96
    %v462 = vpop.permute.xlu0 %461
    %464 = vset.pattern.permute.xlu0 20
    %465 = vperm.xlu0 %464, %v101
    %v466 = vpop.permute.xlu0 %465
    %v468 = vsub.f32 %v462, %v146
    %v469 = vsub.f32 %v466, %v146
    %v470 = vmul.f32 %v448, %v448
    %v471 = vmul.f32 %v449, %v449
    %v472 = vmul.f32 %v458, %v458
    %v473 = vmul.f32 %v459, %v459
    %v474 = vadd.f32 %v470, %v472
    %v475 = vadd.f32 %v471, %v473
    %v476 = vmul.f32 %v468, %v468
    %v477 = vmul.f32 %v469, %v469
    %v478 = vadd.f32 %v474, %v476
    %v479 = vadd.f32 %v475, %v477
    %vm480 = vcmask 523520
    %v481 = vsel %vm480, %v478, inf
    %482 = vmin.xlane.f32.xlu0 %v481
    %v483 = vpop.xlane.xlu0 %482
    %v484 = vsel %vm480, %v479, inf
    %485 = vmin.xlane.f32.xlu0 %v484
    %v486 = vpop.xlane.xlu0 %485
    %v487 = vrsqrt.pop %v483
    %v488 = vmul.f32 %v483, %v487
    %vm489 = vcmp.eq.f32.partialorder %v483, inf
    %v490 = vsel %vm489, %v483, %v488
    %vm491 = vcmp.eq.f32.partialorder %v483, 0.0
    %v492 = vand.u32 %v483, 2147483648
    %v493 = vsel %vm491, %v492, %v490
    %v494 = vrsqrt.pop %v486
    %v495 = vmul.f32 %v486, %v494
    %vm496 = vcmp.eq.f32.partialorder %v486, inf
    %v497 = vsel %vm496, %v486, %v495
    %vm498 = vcmp.eq.f32.partialorder %v486, 0.0
    %v499 = vand.u32 %v486, 2147483648
    %v500 = vsel %vm498, %v499, %v497
    %v501 = vadd.f32 %v493, 0.0
    %v502 = vadd.f32 %v500, 0.0
    %v503 = vmin.f32 %v481, %v484
    %v504 = vrot.slane %v503, 4
    %v505 = vmin.f32 %v503, %v504
    %v506 = vrot.slane %v505, 2
    %v507 = vmin.f32 %v505, %v506
    %v508 = vrot.slane %v507, 1
    %v509 = vmin.f32 %v507, %v508
    %510 = vset.pattern.permute.xlu0 13
    %511 = vperm.xlu0 %510, %v96
    %v512 = vpop.permute.xlu0 %511
    %514 = vset.pattern.permute.xlu0 13
    %515 = vperm.xlu0 %514, %v101
    %v516 = vpop.permute.xlu0 %515
    %v518 = vsub.f32 %v512, %v118
    %v519 = vsub.f32 %v516, %v118
    %520 = vset.pattern.permute.xlu0 17
    %521 = vperm.xlu0 %520, %v96
    %v522 = vpop.permute.xlu0 %521
    %524 = vset.pattern.permute.xlu0 17
    %525 = vperm.xlu0 %524, %v101
    %v526 = vpop.permute.xlu0 %525
    %v528 = vsub.f32 %v522, %v132
    %v529 = vsub.f32 %v526, %v132
    %530 = vset.pattern.permute.xlu0 21
    %531 = vperm.xlu0 %530, %v96
    %v532 = vpop.permute.xlu0 %531
    %534 = vset.pattern.permute.xlu0 21
    %535 = vperm.xlu0 %534, %v101
    %v536 = vpop.permute.xlu0 %535
    %v538 = vsub.f32 %v532, %v146
    %v539 = vsub.f32 %v536, %v146
    %v540 = vmul.f32 %v518, %v518
    %v541 = vmul.f32 %v519, %v519
    %v542 = vmul.f32 %v528, %v528
    %v543 = vmul.f32 %v529, %v529
    %v544 = vadd.f32 %v540, %v542
    %v545 = vadd.f32 %v541, %v543
    %v546 = vmul.f32 %v538, %v538
    %v547 = vmul.f32 %v539, %v539
    %v548 = vadd.f32 %v544, %v546
    %v549 = vadd.f32 %v545, %v547
    %v550 = vsel %vm480, %v548, inf
    %551 = vmin.xlane.f32.xlu0 %v550
    %v552 = vpop.xlane.xlu0 %551
    %v553 = vsel %vm480, %v549, inf
    %554 = vmin.xlane.f32.xlu0 %v553
    %v555 = vpop.xlane.xlu0 %554
    %v556 = vrsqrt.pop %v552
    %v557 = vmul.f32 %v552, %v556
    %vm558 = vcmp.eq.f32.partialorder %v552, inf
    %v559 = vsel %vm558, %v552, %v557
    %vm560 = vcmp.eq.f32.partialorder %v552, 0.0
    %v561 = vand.u32 %v552, 2147483648
    %v562 = vsel %vm560, %v561, %v559
    %v563 = vrsqrt.pop %v555
    %v564 = vmul.f32 %v555, %v563
    %vm565 = vcmp.eq.f32.partialorder %v555, inf
    %v566 = vsel %vm565, %v555, %v564
    %vm567 = vcmp.eq.f32.partialorder %v555, 0.0
    %v568 = vand.u32 %v555, 2147483648
    %v569 = vsel %vm567, %v568, %v566
    %v570 = vadd.f32 %v501, %v562
    %v571 = vadd.f32 %v502, %v569
    %v572 = vmin.f32 %v550, %v553
    %v573 = vrot.slane %v572, 4
    %v574 = vmin.f32 %v572, %v573
    %v575 = vrot.slane %v574, 2
    %v576 = vmin.f32 %v574, %v575
    %v577 = vrot.slane %v576, 1
    %v578 = vmin.f32 %v576, %v577
    %v579 = vmin.f32 %v509, %v578
    %580 = vset.pattern.permute.xlu0 14
    %581 = vperm.xlu0 %580, %v96
    %v582 = vpop.permute.xlu0 %581
    %584 = vset.pattern.permute.xlu0 14
    %585 = vperm.xlu0 %584, %v101
    %v586 = vpop.permute.xlu0 %585
    %v588 = vsub.f32 %v582, %v118
    %v589 = vsub.f32 %v586, %v118
    %590 = vset.pattern.permute.xlu0 18
    %591 = vperm.xlu0 %590, %v96
    %v592 = vpop.permute.xlu0 %591
    %594 = vset.pattern.permute.xlu0 18
    %595 = vperm.xlu0 %594, %v101
    %v596 = vpop.permute.xlu0 %595
    %v598 = vsub.f32 %v592, %v132
    %v599 = vsub.f32 %v596, %v132
    %600 = vset.pattern.permute.xlu0 22
    %601 = vperm.xlu0 %600, %v96
    %v602 = vpop.permute.xlu0 %601
    %604 = vset.pattern.permute.xlu0 22
    %605 = vperm.xlu0 %604, %v101
    %v606 = vpop.permute.xlu0 %605
    %v608 = vsub.f32 %v602, %v146
    %v609 = vsub.f32 %v606, %v146
    %v610 = vmul.f32 %v588, %v588
    %v611 = vmul.f32 %v589, %v589
    %v612 = vmul.f32 %v598, %v598
    %v613 = vmul.f32 %v599, %v599
    %v614 = vadd.f32 %v610, %v612
    %v615 = vadd.f32 %v611, %v613
    %v616 = vmul.f32 %v608, %v608
    %v617 = vmul.f32 %v609, %v609
    %v618 = vadd.f32 %v614, %v616
    %v619 = vadd.f32 %v615, %v617
    %v620 = vsel %vm480, %v618, inf
    %621 = vmin.xlane.f32.xlu0 %v620
    %v622 = vpop.xlane.xlu0 %621
    %v623 = vsel %vm480, %v619, inf
    %624 = vmin.xlane.f32.xlu0 %v623
    %v625 = vpop.xlane.xlu0 %624
    %v626 = vrsqrt.pop %v622
    %v627 = vmul.f32 %v622, %v626
    %vm628 = vcmp.eq.f32.partialorder %v622, inf
    %v629 = vsel %vm628, %v622, %v627
    %vm630 = vcmp.eq.f32.partialorder %v622, 0.0
    %v631 = vand.u32 %v622, 2147483648
    %v632 = vsel %vm630, %v631, %v629
    %v633 = vrsqrt.pop %v625
    %v634 = vmul.f32 %v625, %v633
    %vm635 = vcmp.eq.f32.partialorder %v625, inf
    %v636 = vsel %vm635, %v625, %v634
    %vm637 = vcmp.eq.f32.partialorder %v625, 0.0
    %v638 = vand.u32 %v625, 2147483648
    %v639 = vsel %vm637, %v638, %v636
    %v640 = vadd.f32 %v570, %v632
    %v641 = vadd.f32 %v571, %v639
    %v642 = vmin.f32 %v620, %v623
    %v643 = vrot.slane %v642, 4
    %v644 = vmin.f32 %v642, %v643
    %v645 = vrot.slane %v644, 2
    %v646 = vmin.f32 %v644, %v645
    %v647 = vrot.slane %v646, 1
    %v648 = vmin.f32 %v646, %v647
    %v649 = vmin.f32 %v579, %v648
    %650 = vset.pattern.permute.xlu0 15
    %651 = vperm.xlu0 %650, %v96
    %v652 = vpop.permute.xlu0 %651
    %654 = vset.pattern.permute.xlu0 15
    %655 = vperm.xlu0 %654, %v101
    %v656 = vpop.permute.xlu0 %655
    %v658 = vsub.f32 %v652, %v118
    %v659 = vsub.f32 %v656, %v118
    %660 = vset.pattern.permute.xlu0 19
    %661 = vperm.xlu0 %660, %v96
    %v662 = vpop.permute.xlu0 %661
    %664 = vset.pattern.permute.xlu0 19
    %665 = vperm.xlu0 %664, %v101
    %v666 = vpop.permute.xlu0 %665
    %v668 = vsub.f32 %v662, %v132
    %v669 = vsub.f32 %v666, %v132
    %670 = vset.pattern.permute.xlu0 23
    %671 = vperm.xlu0 %670, %v96
    %v672 = vpop.permute.xlu0 %671
    %674 = vset.pattern.permute.xlu0 23
    %675 = vperm.xlu0 %674, %v101
    %v676 = vpop.permute.xlu0 %675
    %v678 = vsub.f32 %v672, %v146
    %v679 = vsub.f32 %v676, %v146
    %v680 = vmul.f32 %v658, %v658
    %v681 = vmul.f32 %v659, %v659
    %v682 = vmul.f32 %v668, %v668
    %v683 = vmul.f32 %v669, %v669
    %v684 = vadd.f32 %v680, %v682
    %v685 = vadd.f32 %v681, %v683
    %v686 = vmul.f32 %v678, %v678
    %v687 = vmul.f32 %v679, %v679
    %v688 = vadd.f32 %v684, %v686
    %v689 = vadd.f32 %v685, %v687
    %v690 = vsel %vm480, %v688, inf
    %691 = vmin.xlane.f32.xlu0 %v690
    %v692 = vpop.xlane.xlu0 %691
    %v693 = vsel %vm480, %v689, inf
    %694 = vmin.xlane.f32.xlu0 %v693
    %v695 = vpop.xlane.xlu0 %694
    %v696 = vrsqrt.pop %v692
    %v697 = vmul.f32 %v692, %v696
    %vm698 = vcmp.eq.f32.partialorder %v692, inf
    %v699 = vsel %vm698, %v692, %v697
    %vm700 = vcmp.eq.f32.partialorder %v692, 0.0
    %v701 = vand.u32 %v692, 2147483648
    %v702 = vsel %vm700, %v701, %v699
    %v703 = vrsqrt.pop %v695
    %v704 = vmul.f32 %v695, %v703
    %vm705 = vcmp.eq.f32.partialorder %v695, inf
    %v706 = vsel %vm705, %v695, %v704
    %vm707 = vcmp.eq.f32.partialorder %v695, 0.0
    %v708 = vand.u32 %v695, 2147483648
    %v709 = vsel %vm707, %v708, %v706
    %v710 = vadd.f32 %v640, %v702
    %v711 = vadd.f32 %v641, %v709
    %v712 = vmin.f32 %v690, %v693
    %v713 = vrot.slane %v712, 4
    %v714 = vmin.f32 %v712, %v713
    %v715 = vrot.slane %v714, 2
    %v716 = vmin.f32 %v714, %v715
    %v717 = vrot.slane %v716, 1
    %v718 = vmin.f32 %v716, %v717
    %v719 = vmin.f32 %v649, %v718
    %v720 = vsel %vm399, %v710, 0.0
    %v721 = vsel %vm399, %v711, 0.0
    %v722 = vadd.f32 %v720, %v721
    %723 = vadd.xlane.f32.xlu0 %v722
    %v724 = vpop.xlane.xlu0 %723
    %v725 = vrot.slane %v724, 4
    %v726 = vadd.f32 %v724, %v725
    %v727 = vrot.slane %v726, 2
    %v728 = vadd.f32 %v726, %v727
    %v729 = vrot.slane %v728, 1
    %v730 = vadd.f32 %v728, %v729
    %s731 = vtos %v730
    %v732 = vrcp.pop 64.0
    %s733 = vtos %v732
    %s734 = smul.f32 %s731, %s733
    %v735 = vrsqrt.pop %v719
    %v736 = vmul.f32 %v719, %v735
    %vm737 = vcmp.eq.f32.partialorder %v719, inf
    %v738 = vsel %vm737, %v719, %v736
    %vm739 = vcmp.eq.f32.partialorder %v719, 0.0
    %v740 = vand.u32 %v719, 2147483648
    %v741 = vsel %vm739, %v740, %v738
    %743 = vrot.lane.b32.xlu0 %v741, 96
    %v744 = vpop.permute.xlu0 %743
    %v746 = vsel %vm422, %v744, 0.0
    %747 = vadd.xlane.f32.xlu0 %v746
    %v748 = vpop.xlane.xlu0 %747
    %v749 = vrot.slane %v748, 4
    %v750 = vadd.f32 %v748, %v749
    %v751 = vrot.slane %v750, 2
    %v752 = vadd.f32 %v750, %v751
    %v753 = vrot.slane %v752, 1
    %v754 = vadd.f32 %v752, %v753
    %s755 = vtos %v754
    %v756 = vrcp.pop 32.0
    %s757 = vtos %v756
    %s758 = smul.f32 %s755, %s757
    %s759 = sadd.f32 %s758, %s734
    %s760 = smul.f32 %s759, 0.1
    %s761 = scalar_lea.smem [#allocation2], 1
    %762 = sst [smem:[%s761]] %s760
    // Predicated region
    $region14: #{tpu_custom_call.1} parent=1 // pred_check
      _
    $region15: #{tpu_custom_call.1} parent=1 // pred_check_branch
      %764 = sbr.rel (0) target = $region17
    $region16: #{tpu_custom_call.1} parent=1 // pred_region
      %s766 = ssub.s32 16, 16
      %767 = vsyncadd [#allocation3], %s766
      %770 = dma.smem_to_hbm [#allocation2], 16, %s3, [#allocation3]
    $region17: #{tpu_custom_call.1} parent=1 // pred_fallthru
      _
    // Predicated region
    $region18: #{tpu_custom_call.1} parent=1 // pred_check
      _
    $region19: #{tpu_custom_call.1} parent=1 // pred_check_branch
      %772 = sbr.rel (0) target = $region21
    $region20: #{tpu_custom_call.1} parent=1 // pred_region
      %773 = dma.done [#allocation3], 16
    $region21: #{tpu_custom_call.1} parent=1 // pred_fallthru
      _
    %774 = sfence
    %775 = vsyncpa [#allocation3], 1

</llo_original>
